<compile_context>
chip_gen: v7x
topology: tpu7x:2x2x1
jax: 0.10.0
libtpu: 0.0.40
codegen_flags: <defaults>
</compile_context>

<pallas_src>
from functools import partial

import jax
import jax.numpy as jnp
from jax import lax
from jax.experimental import pallas as pl
from jax.experimental.pallas import tpu as pltpu


def _ca_sa_kernel(f1_ref, f2_ref, wq_ref, wk_ref, wv_ref,
                  bq_ref, bk_ref, bv_ref, o_ref, kt_ref, v_ref,
                  *, cache_kv, fast_math):
    """One (batch, query-tile) grid step.

    f1_ref : (1, TQ, D)  query-side features      f2_ref : (1, N2, D) key/value side
    wq_ref : (D, D) Wq^T   wk_ref : (D, D) Wk (torch layout)   wv_ref : (D, D) Wv^T
    bq_ref : (1, D)        bk_ref : (D, 1)                     bv_ref : (1, D)
    o_ref  : (1, TQ, D)
    kt_ref : (D, N2) f32 scratch  -- K^T cached per batch element
    v_ref  : (N2, D) f32 scratch  -- V   cached per batch element
    """

    def project_kv():
        f2 = f2_ref[0]                                           # (N2, D), native dtype
        # K^T[d, n] = sum_i Wk[d, i] * feat2[n, i]  -> computed straight into
        # the transposed cache so Q @ K^T needs no per-tile transpose.
        kt_ref[...] = lax.dot_general(
            wk_ref[...], f2, (((1,), (1,)), ((), ())),
            preferred_element_type=jnp.float32) + bk_ref[...]     # (D, N2)
        v_ref[...] = jnp.dot(f2, wv_ref[...],
                             preferred_element_type=jnp.float32) + bv_ref[...]  # (N2, D)

    if cache_kv:
        # Query-tile axis is "arbitrary": qi == 0 runs first for every batch
        # element, so the scratch cache is always valid when read below.
        @pl.when(pl.program_id(1) == 0)
        def _():
            project_kv()
    else:
        project_kv()

    # Q projection for this query tile (native dtype operands, f32 accumulate).
    q = jnp.dot(f1_ref[0], wq_ref[...],
                preferred_element_type=jnp.float32) + bq_ref[...]            # (TQ, D)

    # Attention scores (the module applies no 1/sqrt(d) scaling).
    dots = jnp.dot(q, kt_ref[...], preferred_element_type=jnp.float32)       # (TQ, N2)

    # Numerically-stable softmax with deferred normalization.
    m = jnp.max(dots, axis=-1, keepdims=True)                                # (TQ, 1)
    e = jnp.exp(dots - m)                                                    # (TQ, N2)
    l = jnp.sum(e, axis=-1, keepdims=True)                                   # (TQ, 1)

    if fast_math:
        out = jnp.dot(e.astype(jnp.bfloat16), v_ref[...].astype(jnp.bfloat16),
                      preferred_element_type=jnp.float32)                    # (TQ, D)
        out = out * pl.reciprocal(l, approx=True)
    else:
        out = jnp.dot(e, v_ref[...], preferred_element_type=jnp.float32)     # (TQ, D)
        out = out * pl.reciprocal(l, approx=False)

    o_ref[0] = out.astype(o_ref.dtype)


def _padded_bytes(shape, dtype):
    """VMEM footprint of a buffer with (8, 128) tile padding on the last two dims."""
    dims = list(shape)
    if len(dims) >= 1:
        dims[-1] = -(-dims[-1] // 128) * 128
    if len(dims) >= 2:
        dims[-2] = -(-dims[-2] // 8) * 8
    n = 1
    for d in dims:
        n *= d
    return n * jnp.dtype(dtype).itemsize


def ca_sa_forward(feat1, feat2, wq, bq, wk, bk, wv, bv, *, fast_math=False):
    """CA_SA forward.

    feat1: (B, N1, D) queries; feat2: (B, N2, D) keys/values.
    wq/wk/wv: (D, D) in PyTorch nn.Linear layout (out_features, in_features).
    bq/bk/bv: (D,).  Returns (B, N1, D) in feat1's dtype.
    """
    B, N1, D = feat1.shape
    _, N2, D2 = feat2.shape
    assert D == D2 and wq.shape == (D, D) and wk.shape == (D, D) and wv.shape == (D, D)

    # Pre-transpose Q / V weights so the kernel does lane-dense x @ Wt.
    # Wk stays in torch layout because K is computed directly in (D, N2)
    # orientation inside the kernel.
    wq_t = wq.T
    wv_t = wv.T
    bq2 = bq.reshape(1, D).astype(jnp.float32)
    bk2 = bk.reshape(D, 1).astype(jnp.float32)
    bv2 = bv.reshape(1, D).astype(jnp.float32)

    # Fixed query tile: 128 is a multiple of 8 (f32) and 16 (bf16); the ragged
    # last tile is handled by cdiv.  Use the full extent when N1 is small.
    tq = N1 if N1 <= 128 else 128
    n_qi = pl.cdiv(N1, tq)
    grid = (B, n_qi)

    if B > 1:
        # Cache K/V per batch element; the batch axis carries megacore parallelism.
        cache_kv, dims = True, ("parallel", "arbitrary")
    else:
        # B == 1: keep both v7x cores busy on query tiles; K/V are recomputed
        # per tile (cheap relative to losing a whole TensorCore).
        cache_kv, dims = False, ("parallel", "parallel")

    # Scoped-VMEM budget from the actual footprint (double-buffered blocks +
    # scratch + softmax temporaries), capped below v7x's 64 MiB physical VMEM.
    est = (
        2 * _padded_bytes((1, tq, D), feat1.dtype)        # feat1 block (x2 buffers)
        + 2 * _padded_bytes((1, N2, D), feat2.dtype)      # feat2 block
        + 2 * 3 * _padded_bytes((D, D), wq_t.dtype)       # Wq^T, Wk, Wv^T
        + 2 * 2 * _padded_bytes((1, D), jnp.float32)      # bq, bv
        + 2 * _padded_bytes((D, 1), jnp.float32)          # bk
        + 2 * _padded_bytes((1, tq, D), feat1.dtype)      # output block
        + _padded_bytes((D, N2), jnp.float32)             # K^T scratch
        + _padded_bytes((N2, D), jnp.float32)             # V scratch
        + 6 * _padded_bytes((tq, N2), jnp.float32)        # dots / exp temporaries
        + 6 * _padded_bytes((tq, D), jnp.float32)         # q / out temporaries
    )
    vmem_limit = int(min(max(2 * est, 32 * 1024 * 1024), 60 * 1024 * 1024))

    kernel = partial(_ca_sa_kernel, cache_kv=cache_kv, fast_math=fast_math)

    w_spec = pl.BlockSpec((D, D), lambda b, qi: (0, 0))

    return pl.pallas_call(
        kernel,
        out_shape=jax.ShapeDtypeStruct((B, N1, D), feat1.dtype),
        grid_spec=pltpu.PrefetchScalarGridSpec(
            num_scalar_prefetch=0,
            grid=grid,
            in_specs=[
                pl.BlockSpec((1, tq, D), lambda b, qi: (b, qi, 0)),   # feat1 tile
                pl.BlockSpec((1, N2, D), lambda b, qi: (b, 0, 0)),    # feat2 (all keys)
                w_spec, w_spec, w_spec,                               # Wq^T, Wk, Wv^T
                pl.BlockSpec((1, D), lambda b, qi: (0, 0)),           # bq
                pl.BlockSpec((D, 1), lambda b, qi: (0, 0)),           # bk (column)
                pl.BlockSpec((1, D), lambda b, qi: (0, 0)),           # bv
            ],
            out_specs=pl.BlockSpec((1, tq, D), lambda b, qi: (b, qi, 0)),
            scratch_shapes=[
                pltpu.VMEM((D, N2), jnp.float32),   # K^T cache (per batch element)
                pltpu.VMEM((N2, D), jnp.float32),   # V   cache (per batch element)
            ],
        ),
        compiler_params=pltpu.CompilerParams(
            dimension_semantics=dims,
            vmem_limit_bytes=vmem_limit,
        ),
    )(feat1, feat2, wq_t, wk, wv_t, bq2, bk2, bv2)


def _reference(feat1, feat2, wq, bq, wk, bk, wv, bv):
    """Pure-JAX mirror of the PyTorch module (for validation)."""
    q = jnp.einsum('bnd,od->bno', feat1, wq) + bq
    k = jnp.einsum('bnd,od->bno', feat2, wk) + bk
    v = jnp.einsum('bnd,od->bno', feat2, wv) + bv
    dots = jnp.einsum('bqd,bkd->bqk', q, k)
    attn = jax.nn.softmax(dots, axis=-1)
    return jnp.einsum('bqk,bkd->bqd', attn, v)


def _run_case(key, B, N1, N2, D):
    ks = jax.random.split(key, 8)
    feat1 = jax.random.normal(ks[0], (B, N1, D), dtype=jnp.float32)
    feat2 = jax.random.normal(ks[1], (B, N2, D), dtype=jnp.float32)
    bound = 1.0 / (D ** 0.5)   # nn.Linear default init range
    wq = jax.random.uniform(ks[2], (D, D), jnp.float32, -bound, bound)
    wk = jax.random.uniform(ks[3], (D, D), jnp.float32, -bound, bound)
    wv = jax.random.uniform(ks[4], (D, D), jnp.float32, -bound, bound)
    bq = jax.random.uniform(ks[5], (D,), jnp.float32, -bound, bound)
    bk = jax.random.uniform(ks[6], (D,), jnp.float32, -bound, bound)
    bv = jax.random.uniform(ks[7], (D,), jnp.float32, -bound, bound)

    out = jax.block_until_ready(ca_sa_forward(feat1, feat2, wq, bq, wk, bk, wv, bv))
    ref = _reference(feat1, feat2, wq, bq, wk, bk, wv, bv)
    assert out.shape == (B, N1, D), out.shape
    err = float(jnp.max(jnp.abs(out - ref)))
    assert jnp.allclose(out, ref, atol=1e-4, rtol=1e-4), (B, N1, N2, D, err)


if __name__ == "__main__":
    key = jax.random.PRNGKey(0)
    k0, k1, k2 = jax.random.split(key, 3)

    # Module's nominal shapes (dim=32): small batch / sequence.
    _run_case(k0, B=2, N1=8, N2=16, D=32)
    # Multi-query-tile path: exercises the per-batch K/V cache + ragged tile.
    _run_case(k1, B=2, N1=160, N2=48, D=32)
    # Single-batch path: K/V recomputed per tile, query tiles megacore-parallel.
    _run_case(k2, B=1, N1=144, N2=40, D=32)

    print("KERNEL_OK")
</pallas_src>

<mosaic_0001>
module attributes {stable_mosaic.version = 11 : i64} {
  func.func @_ca_sa_kernel(%arg0: i32, %arg1: i32, %arg2: memref<1x8x32xf32, #tpu.memory_space<vmem>>, %arg3: memref<1x16x32xf32, #tpu.memory_space<vmem>>, %arg4: memref<32x32xf32, #tpu.memory_space<vmem>>, %arg5: memref<32x32xf32, #tpu.memory_space<vmem>>, %arg6: memref<32x32xf32, #tpu.memory_space<vmem>>, %arg7: memref<1x32xf32, #tpu.memory_space<vmem>>, %arg8: memref<32x1xf32, #tpu.memory_space<vmem>>, %arg9: memref<1x32xf32, #tpu.memory_space<vmem>>, %arg10: memref<1x8x32xf32, #tpu.memory_space<vmem>>, %arg11: memref<32x16xf32, #tpu.memory_space<vmem>>, %arg12: memref<16x32xf32, #tpu.memory_space<vmem>>) attributes {dimension_semantics = [#tpu.dimension_semantics<parallel>, #tpu.dimension_semantics<arbitrary>], iteration_bounds = array<i64: 2, 1>, scalar_prefetch = 0 : i64, scratch_operands = 2 : i64, tpu.core_type = #tpu.core_type<tc>, window_params = [{transform_indices = @transform_0, window_bounds = array<i64: 1, 8, 32>}, {transform_indices = @transform_1, window_bounds = array<i64: 1, 16, 32>}, {pipeline_mode = #tpu.pipeline_mode<synchronous>, transform_indices = @transform_2, window_bounds = array<i64: 32, 32>}, {pipeline_mode = #tpu.pipeline_mode<synchronous>, transform_indices = @transform_3, window_bounds = array<i64: 32, 32>}, {pipeline_mode = #tpu.pipeline_mode<synchronous>, transform_indices = @transform_4, window_bounds = array<i64: 32, 32>}, {pipeline_mode = #tpu.pipeline_mode<synchronous>, transform_indices = @transform_5, window_bounds = array<i64: 1, 32>}, {pipeline_mode = #tpu.pipeline_mode<synchronous>, transform_indices = @transform_6, window_bounds = array<i64: 32, 1>}, {pipeline_mode = #tpu.pipeline_mode<synchronous>, transform_indices = @transform_7, window_bounds = array<i64: 1, 32>}, {transform_indices = @transform_8, window_bounds = array<i64: 1, 8, 32>}]} {
    %c0_i32 = arith.constant 0 : i32
    %0 = arith.cmpi eq, %arg1, %c0_i32 : i32
    %1 = arith.extui %0 : i1 to i32
    %c0_i32_0 = arith.constant 0 : i32
    %2 = arith.cmpi ne, %1, %c0_i32_0 : i32
    scf.if %2 {
      %c0_18 = arith.constant 0 : index
      %c0_19 = arith.constant 0 : index
      %c0_20 = arith.constant 0 : index
      %27 = vector.load %arg3[%c0_18, %c0_19, %c0_20] : memref<1x16x32xf32, #tpu.memory_space<vmem>>, vector<1x16x32xf32>
      %28 = vector.shape_cast %27 : vector<1x16x32xf32> to vector<16x32xf32>
      %c0_21 = arith.constant 0 : index
      %c0_22 = arith.constant 0 : index
      %29 = vector.load %arg5[%c0_21, %c0_22] : memref<32x32xf32, #tpu.memory_space<vmem>>, vector<32x32xf32>
      %cst_23 = arith.constant dense<0.000000e+00> : vector<32x16xf32>
      %30 = tpu.matmul %29, %28, %cst_23 {dimension_numbers = #tpu.dot_dimension_numbers<[1], [1], [0], [0], [0, 0, 1, 0], [], []>} : vector<32x32xf32>, vector<16x32xf32>, vector<32x16xf32> -> vector<32x16xf32>
      %c0_24 = arith.constant 0 : index
      %c0_25 = arith.constant 0 : index
      %31 = vector.load %arg8[%c0_24, %c0_25] : memref<32x1xf32, #tpu.memory_space<vmem>>, vector<32x1xf32>
      %32 = vector.broadcast %31 : vector<32x1xf32> to vector<32x16xf32>
      %33 = arith.addf %30, %32 : vector<32x16xf32>
      %c0_26 = arith.constant 0 : index
      %c0_27 = arith.constant 0 : index
      %34 = vector.load %arg11[%c0_26, %c0_27] : memref<32x16xf32, #tpu.memory_space<vmem>>, vector<32x16xf32>
      tpu.vector_store %arg11[%c0_26, %c0_27], %33 {strides = array<i32>} : memref<32x16xf32, #tpu.memory_space<vmem>>, vector<32x16xf32>,
      %c0_28 = arith.constant 0 : index
      %c0_29 = arith.constant 0 : index
      %35 = vector.load %arg6[%c0_28, %c0_29] : memref<32x32xf32, #tpu.memory_space<vmem>>, vector<32x32xf32>
      %cst_30 = arith.constant dense<0.000000e+00> : vector<16x32xf32>
      %36 = tpu.matmul %28, %35, %cst_30 {dimension_numbers = #tpu.dot_dimension_numbers<[1], [0], [0], [1], [0, 0, 1, 1], [], []>} : vector<16x32xf32>, vector<32x32xf32>, vector<16x32xf32> -> vector<16x32xf32>
      %c0_31 = arith.constant 0 : index
      %c0_32 = arith.constant 0 : index
      %37 = vector.load %arg9[%c0_31, %c0_32] : memref<1x32xf32, #tpu.memory_space<vmem>>, vector<1x32xf32>
      %38 = vector.broadcast %37 : vector<1x32xf32> to vector<16x32xf32>
      %39 = arith.addf %36, %38 : vector<16x32xf32>
      %c0_33 = arith.constant 0 : index
      %c0_34 = arith.constant 0 : index
      %40 = vector.load %arg12[%c0_33, %c0_34] : memref<16x32xf32, #tpu.memory_space<vmem>>, vector<16x32xf32>
      tpu.vector_store %arg12[%c0_33, %c0_34], %39 {strides = array<i32>} : memref<16x32xf32, #tpu.memory_space<vmem>>, vector<16x32xf32>,
    } else {
    }
    %c0 = arith.constant 0 : index
    %c0_1 = arith.constant 0 : index
    %c0_2 = arith.constant 0 : index
    %3 = vector.load %arg2[%c0, %c0_1, %c0_2] : memref<1x8x32xf32, #tpu.memory_space<vmem>>, vector<1x8x32xf32>
    %4 = vector.shape_cast %3 : vector<1x8x32xf32> to vector<8x32xf32>
    %c0_3 = arith.constant 0 : index
    %c0_4 = arith.constant 0 : index
    %5 = vector.load %arg4[%c0_3, %c0_4] : memref<32x32xf32, #tpu.memory_space<vmem>>, vector<32x32xf32>
    %cst = arith.constant dense<0.000000e+00> : vector<8x32xf32>
    %6 = tpu.matmul %4, %5, %cst {dimension_numbers = #tpu.dot_dimension_numbers<[1], [0], [0], [1], [0, 0, 1, 1], [], []>} : vector<8x32xf32>, vector<32x32xf32>, vector<8x32xf32> -> vector<8x32xf32>
    %c0_5 = arith.constant 0 : index
    %c0_6 = arith.constant 0 : index
    %7 = vector.load %arg7[%c0_5, %c0_6] : memref<1x32xf32, #tpu.memory_space<vmem>>, vector<1x32xf32>
    %8 = vector.broadcast %7 : vector<1x32xf32> to vector<8x32xf32>
    %9 = arith.addf %6, %8 : vector<8x32xf32>
    %c0_7 = arith.constant 0 : index
    %c0_8 = arith.constant 0 : index
    %10 = vector.load %arg11[%c0_7, %c0_8] : memref<32x16xf32, #tpu.memory_space<vmem>>, vector<32x16xf32>
    %cst_9 = arith.constant dense<0.000000e+00> : vector<8x16xf32>
    %11 = tpu.matmul %9, %10, %cst_9 {dimension_numbers = #tpu.dot_dimension_numbers<[1], [0], [0], [1], [0, 0, 1, 1], [], []>} : vector<8x32xf32>, vector<32x16xf32>, vector<8x16xf32> -> vector<8x16xf32>
    %cst_10 = arith.constant dense<0xFF800000> : vector<8xf32>
    %12 = vector.multi_reduction <maximumf>, %11, %cst_10 [1] : vector<8x16xf32> to vector<8xf32>
    %13 = vector.shape_cast %12 : vector<8xf32> to vector<8x1xf32>
    %14 = vector.broadcast %13 : vector<8x1xf32> to vector<8x16xf32>
    %15 = arith.subf %11, %14 : vector<8x16xf32>
    %16 = math.exp %15 : vector<8x16xf32>
    %cst_11 = arith.constant dense<0.000000e+00> : vector<8xf32>
    %17 = vector.multi_reduction <add>, %16, %cst_11 [1] : vector<8x16xf32> to vector<8xf32>
    %18 = vector.shape_cast %17 : vector<8xf32> to vector<8x1xf32>
    %c0_12 = arith.constant 0 : index
    %c0_13 = arith.constant 0 : index
    %19 = vector.load %arg12[%c0_12, %c0_13] : memref<16x32xf32, #tpu.memory_space<vmem>>, vector<16x32xf32>
    %cst_14 = arith.constant dense<0.000000e+00> : vector<8x32xf32>
    %20 = tpu.matmul %16, %19, %cst_14 {dimension_numbers = #tpu.dot_dimension_numbers<[1], [0], [0], [1], [0, 0, 1, 1], [], []>} : vector<8x16xf32>, vector<16x32xf32>, vector<8x32xf32> -> vector<8x32xf32>
    %21 = tpu.reciprocal %18 : vector<8x1xf32> -> vector<8x1xf32>
    %22 = vector.broadcast %21 : vector<8x1xf32> to vector<8x32xf32>
    %23 = arith.mulf %20, %22 : vector<8x32xf32>
    %c0_15 = arith.constant 0 : index
    %c0_16 = arith.constant 0 : index
    %c0_17 = arith.constant 0 : index
    %24 = vector.load %arg10[%c0_15, %c0_16, %c0_17] : memref<1x8x32xf32, #tpu.memory_space<vmem>>, vector<1x8x32xf32>
    %25 = vector.shape_cast %24 : vector<1x8x32xf32> to vector<8x32xf32>
    %26 = vector.shape_cast %23 : vector<8x32xf32> to vector<1x8x32xf32>
    tpu.vector_store %arg10[%c0_15, %c0_16, %c0_17], %26 {strides = array<i32>} : memref<1x8x32xf32, #tpu.memory_space<vmem>>, vector<1x8x32xf32>,
    return
  }
  func.func @transform_0(%arg0: i32, %arg1: i32) -> (i32, i32, i32) {
    %c0_i32 = arith.constant 0 : i32
    %c0_i32_0 = arith.constant 0 : i32
    return %arg0, %arg1, %c0_i32 : i32, i32, i32
  }
  func.func @transform_1(%arg0: i32, %arg1: i32) -> (i32, i32, i32) {
    %c0_i32 = arith.constant 0 : i32
    %c0_i32_0 = arith.constant 0 : i32
    %c0_i32_1 = arith.constant 0 : i32
    return %arg0, %c0_i32, %c0_i32_0 : i32, i32, i32
  }
  func.func @transform_2(%arg0: i32, %arg1: i32) -> (i32, i32) {
    %c0_i32 = arith.constant 0 : i32
    %c0_i32_0 = arith.constant 0 : i32
    %c0_i32_1 = arith.constant 0 : i32
    return %c0_i32, %c0_i32_0 : i32, i32
  }
  func.func @transform_3(%arg0: i32, %arg1: i32) -> (i32, i32) {
    %c0_i32 = arith.constant 0 : i32
    %c0_i32_0 = arith.constant 0 : i32
    %c0_i32_1 = arith.constant 0 : i32
    return %c0_i32, %c0_i32_0 : i32, i32
  }
  func.func @transform_4(%arg0: i32, %arg1: i32) -> (i32, i32) {
    %c0_i32 = arith.constant 0 : i32
    %c0_i32_0 = arith.constant 0 : i32
    %c0_i32_1 = arith.constant 0 : i32
    return %c0_i32, %c0_i32_0 : i32, i32
  }
  func.func @transform_5(%arg0: i32, %arg1: i32) -> (i32, i32) {
    %c0_i32 = arith.constant 0 : i32
    %c0_i32_0 = arith.constant 0 : i32
    %c0_i32_1 = arith.constant 0 : i32
    return %c0_i32, %c0_i32_0 : i32, i32
  }
  func.func @transform_6(%arg0: i32, %arg1: i32) -> (i32, i32) {
    %c0_i32 = arith.constant 0 : i32
    %c0_i32_0 = arith.constant 0 : i32
    %c0_i32_1 = arith.constant 0 : i32
    return %c0_i32, %c0_i32_0 : i32, i32
  }
  func.func @transform_7(%arg0: i32, %arg1: i32) -> (i32, i32) {
    %c0_i32 = arith.constant 0 : i32
    %c0_i32_0 = arith.constant 0 : i32
    %c0_i32_1 = arith.constant 0 : i32
    return %c0_i32, %c0_i32_0 : i32, i32
  }
  func.func @transform_8(%arg0: i32, %arg1: i32) -> (i32, i32, i32) {
    %c0_i32 = arith.constant 0 : i32
    %c0_i32_0 = arith.constant 0 : i32
    return %arg0, %arg1, %c0_i32 : i32, i32, i32
  }
}

</mosaic_0001>

<llo_original>
// kernel: tpu_custom_call.1
$region0: #{tpu_custom_call.1}
  #allocation0 [shape = 'u32[]', space=smem, size = 0x4, offset = 0x4, fixed_abs, tag = 'smem constant byte address 0x4 - core index']
  #allocation1 [shape = 'u32[144,128]{1,0:T(1,128)}', space=vmem, size = 0x12000, scoped, tag = 'internal scratch']
  #allocation2 [shape = 'f32[32,16]{1,0:T(8,128)}', space=vmem, size = 0x4000, scoped, tag = 'scratch operand']
  #allocation3 [shape = 'f32[16,32]{1,0:T(8,128)}', space=vmem, size = 0x2000, scoped, tag = 'scratch operand']
  %s0 = inlined_call_operand.hbm [shape: f32[2,8,32], index: 0, kind: input, shape index: {}]
  %s1 = inlined_call_operand.vmem [shape: f32[2,16,32], index: 1, kind: input, shape index: {}]
  %s2 = inlined_call_operand.hbm [shape: f32[32,32], index: 2, kind: input, shape index: {}]
  %s3 = inlined_call_operand.hbm [shape: f32[32,32], index: 3, kind: input, shape index: {}]
  %s4 = inlined_call_operand.hbm [shape: f32[32,32], index: 4, kind: input, shape index: {}]
  %s5 = inlined_call_operand.vmem [shape: f32[1,32], index: 5, kind: input, shape index: {}]
  %s6 = inlined_call_operand.vmem [shape: f32[32,1], index: 6, kind: input, shape index: {}]
  %s7 = inlined_call_operand.vmem [shape: f32[1,32], index: 7, kind: input, shape index: {}]
  %s8 = inlined_call_operand.hbm [shape: f32[2,8,32], index: 8, kind: output, shape index: {}]
  %s9 = sld [smem:[#allocation0]]
  $region85: #{tpu_custom_call.1} parent=0
    _
  %s11 = ssub.s32 1, %s9
  %s12 = scalar_select 0, %s11, %s9
  $region1: #{tpu_custom_call.1} parent=0
    #allocation4 [shape = 'u8[8192]{0}', space=vmem, size = 0x2000, scoped, tag = 'input window, operand 0']
    #allocation5 [shape = 's32[2]{0}', space=sflag, size = 0x8, scoped, tag = 'scoped memory for tpu_custom_call.1']
    #allocation6 [shape = 's32[2]{0}', space=sflag, size = 0x8, scoped, tag = 'scoped memory for tpu_custom_call.1']
    #allocation7 [shape = 'u8[16384]{0}', space=vmem, size = 0x4000, scoped, tag = 'input window, operand 2, single buffered']
    #allocation8 [shape = 's32[1]{0}', space=sflag, size = 0x4, scoped, tag = 'scoped memory for tpu_custom_call.1']
    #allocation9 [shape = 'u8[16384]{0}', space=vmem, size = 0x4000, scoped, tag = 'input window, operand 3, single buffered']
    #allocation10 [shape = 'u8[16384]{0}', space=vmem, size = 0x4000, scoped, tag = 'input window, operand 4, single buffered']
    #allocation11 [shape = 's32[1]{0}', space=sflag, size = 0x4, scoped, tag = 'scoped memory for tpu_custom_call.1']
    #allocation12 [shape = 'u8[8192]{0}', space=vmem, size = 0x2000, scoped, tag = 'output window, operand 0']
    %13 = vsyncpa [#allocation5], 0
    %s14 = scalar_lea.sflag [#allocation5], 1
    %15 = vsyncpa %s14, 0
    %16 = vsyncpa [#allocation8], 0
    %17 = vsyncpa [#allocation11], 0
    %18 = vsyncpa [#allocation6], 0
    %s19 = scalar_lea.sflag [#allocation6], 1
    %20 = vsyncpa %s19, 0
    loop: start=0, step=1, limit=4
    $region2: #{tpu_custom_call.1} parent=1 // loop_pre_header
      _
    $region3: #{tpu_custom_call.1} parent=1 // loop_header
      %s22 = sphi 0, %s26
      %p23 = scmp.ge.s32.totalorder %s22, 4
      %s29 = sphi 0, %s41
      %s30 = sphi 0, %s37
      %s31 = sphi 0, %s29
      %s32 = sphi 0, %s30
      %s33 = sphi 0, %s31
      %s34 = sphi 0, %s32
      %s46 = sphi 0, %s48
      %s49 = sphi 0, %s46
      %s50 = sphi 0, %s49
      %s66 = sphi 0, %s50
      %s72 = sphi 0, %s74
      %s75 = sphi 0, %s72
      %s76 = sphi 0, %s75
      %s92 = sphi 0, %s76
      %s96 = sphi 0, %s96
      %s98 = sphi 0, %s96
      %s99 = sphi 0, %s98
      %s113 = sphi 0, %s99
      %s117 = sphi 0, %s117
      %s119 = sphi 0, %s117
      %s120 = sphi 0, %s119
      %s134 = sphi 0, %s120
      %s138 = sphi 0, %s138
      %s140 = sphi 0, %s138
      %s141 = sphi 0, %s140
      %s155 = sphi 0, %s141
      %s159 = sphi 0, %s159
      %s161 = sphi 0, %s159
      %s162 = sphi 0, %s161
      %s176 = sphi 0, %s162
      %s180 = sphi 0, %s180
      %s182 = sphi 0, %s180
      %s183 = sphi 0, %s182
      %s197 = sphi 0, %s183
      %s201 = sphi 0, %s201
      %s203 = sphi 0, %s201
      %s204 = sphi 0, %s203
      %s218 = sphi 0, %s204
      %s226 = sphi 0, %s228
      %s229 = sphi 0, %s226
      %s230 = sphi 0, %s229
      %s246 = sphi 0, %s230
    $region4: #{tpu_custom_call.1} parent=1 // loop_header_branch
      %25 = sbr.rel (%p23) target = $region8
    $region5: #{tpu_custom_call.1} parent=1 // loop_body
      %s27 = ssub.s32 %s22, 1
      %s28 = ssub.s32 %s22, 2
      %s35 = sadd.s32 1, %s30
      %p36 = scmp.ge.s32.totalorder %s35, 1
      %s37 = scalar_select %p36, 0, %s35
      %s38 = sadd.s32 1, %s29
      %s39 = scalar_select %p36, %s38, %s29
      %p40 = scmp.ge.s32.totalorder %s39, 2
      %s41 = scalar_select %p40, 0, %s39
      %s42 = ssub.s32 %s29, %s41
      %s43 = ssub.s32 %s30, %s37
      %s44 = sor.u32 %s42, %s43
      %p45 = scmp.eq.s32.totalorder %s44, 0
      %s47 = sadd.s32 %s46, 1
      %s48 = scalar_select %p45, %s46, %s47
      %p51 = pneg %p45
      %p52 = scmp.eq.s32.totalorder %s22, 1
      %p53 = por %p51, %p52
      %p54 = scmp.ne.s32.totalorder %s46, %s49
      %p55 = scmp.eq.s32.totalorder %s22, 0
      %p56 = por %p54, %p55
      %p57 = scmp.ne.s32.totalorder %s46, %s49
      %p58 = scmp.eq.s32.totalorder %s27, 1
      %p59 = por %p57, %p58
      %p60 = scmp.ne.s32.totalorder %s49, %s50
      %p61 = scmp.eq.s32.totalorder %s27, 0
      %p62 = por %p60, %p61
      %p63 = scmp.ne.s32.totalorder %s49, %s50
      %p64 = scmp.eq.s32.totalorder %s28, 1
      %p65 = por %p63, %p64
      %p67 = scmp.ne.s32.totalorder %s50, %s66
      %p68 = scmp.eq.s32.totalorder %s28, 0
      %p69 = por %p67, %p68
      %s70 = ssub.s32 %s29, %s41
      %p71 = scmp.eq.s32.totalorder %s70, 0
      %s73 = sadd.s32 %s72, 1
      %s74 = scalar_select %p71, %s72, %s73
      %p77 = pneg %p71
      %p78 = scmp.eq.s32.totalorder %s22, 1
      %p79 = por %p77, %p78
      %p80 = scmp.ne.s32.totalorder %s72, %s75
      %p81 = scmp.eq.s32.totalorder %s22, 0
      %p82 = por %p80, %p81
      %p83 = scmp.ne.s32.totalorder %s72, %s75
      %p84 = scmp.eq.s32.totalorder %s27, 1
      %p85 = por %p83, %p84
      %p86 = scmp.ne.s32.totalorder %s75, %s76
      %p87 = scmp.eq.s32.totalorder %s27, 0
      %p88 = por %p86, %p87
      %p89 = scmp.ne.s32.totalorder %s75, %s76
      %p90 = scmp.eq.s32.totalorder %s28, 1
      %p91 = por %p89, %p90
      %p93 = scmp.ne.s32.totalorder %s76, %s92
      %p94 = scmp.eq.s32.totalorder %s28, 0
      %p95 = por %p93, %p94
      %s97 = sadd.s32 %s96, 1
      %p100 = scmp.eq.s32.totalorder %s22, 1
      %p101 = scmp.ne.s32.totalorder %s96, %s98
      %p102 = scmp.eq.s32.totalorder %s22, 0
      %p103 = por %p101, %p102
      %p104 = scmp.ne.s32.totalorder %s96, %s98
      %p105 = scmp.eq.s32.totalorder %s27, 1
      %p106 = por %p104, %p105
      %p107 = scmp.ne.s32.totalorder %s98, %s99
      %p108 = scmp.eq.s32.totalorder %s27, 0
      %p109 = por %p107, %p108
      %p110 = scmp.ne.s32.totalorder %s98, %s99
      %p111 = scmp.eq.s32.totalorder %s28, 1
      %p112 = por %p110, %p111
      %p114 = scmp.ne.s32.totalorder %s99, %s113
      %p115 = scmp.eq.s32.totalorder %s28, 0
      %p116 = por %p114, %p115
      %s118 = sadd.s32 %s117, 1
      %p121 = scmp.eq.s32.totalorder %s22, 1
      %p122 = scmp.ne.s32.totalorder %s117, %s119
      %p123 = scmp.eq.s32.totalorder %s22, 0
      %p124 = por %p122, %p123
      %p125 = scmp.ne.s32.totalorder %s117, %s119
      %p126 = scmp.eq.s32.totalorder %s27, 1
      %p127 = por %p125, %p126
      %p128 = scmp.ne.s32.totalorder %s119, %s120
      %p129 = scmp.eq.s32.totalorder %s27, 0
      %p130 = por %p128, %p129
      %p131 = scmp.ne.s32.totalorder %s119, %s120
      %p132 = scmp.eq.s32.totalorder %s28, 1
      %p133 = por %p131, %p132
      %p135 = scmp.ne.s32.totalorder %s120, %s134
      %p136 = scmp.eq.s32.totalorder %s28, 0
      %p137 = por %p135, %p136
      %s139 = sadd.s32 %s138, 1
      %p142 = scmp.eq.s32.totalorder %s22, 1
      %p143 = scmp.ne.s32.totalorder %s138, %s140
      %p144 = scmp.eq.s32.totalorder %s22, 0
      %p145 = por %p143, %p144
      %p146 = scmp.ne.s32.totalorder %s138, %s140
      %p147 = scmp.eq.s32.totalorder %s27, 1
      %p148 = por %p146, %p147
      %p149 = scmp.ne.s32.totalorder %s140, %s141
      %p150 = scmp.eq.s32.totalorder %s27, 0
      %p151 = por %p149, %p150
      %p152 = scmp.ne.s32.totalorder %s140, %s141
      %p153 = scmp.eq.s32.totalorder %s28, 1
      %p154 = por %p152, %p153
      %p156 = scmp.ne.s32.totalorder %s141, %s155
      %p157 = scmp.eq.s32.totalorder %s28, 0
      %p158 = por %p156, %p157
      %s160 = sadd.s32 %s159, 1
      %p163 = scmp.eq.s32.totalorder %s22, 1
      %p164 = scmp.ne.s32.totalorder %s159, %s161
      %p165 = scmp.eq.s32.totalorder %s22, 0
      %p166 = por %p164, %p165
      %p167 = scmp.ne.s32.totalorder %s159, %s161
      %p168 = scmp.eq.s32.totalorder %s27, 1
      %p169 = por %p167, %p168
      %p170 = scmp.ne.s32.totalorder %s161, %s162
      %p171 = scmp.eq.s32.totalorder %s27, 0
      %p172 = por %p170, %p171
      %p173 = scmp.ne.s32.totalorder %s161, %s162
      %p174 = scmp.eq.s32.totalorder %s28, 1
      %p175 = por %p173, %p174
      %p177 = scmp.ne.s32.totalorder %s162, %s176
      %p178 = scmp.eq.s32.totalorder %s28, 0
      %p179 = por %p177, %p178
      %s181 = sadd.s32 %s180, 1
      %p184 = scmp.eq.s32.totalorder %s22, 1
      %p185 = scmp.ne.s32.totalorder %s180, %s182
      %p186 = scmp.eq.s32.totalorder %s22, 0
      %p187 = por %p185, %p186
      %p188 = scmp.ne.s32.totalorder %s180, %s182
      %p189 = scmp.eq.s32.totalorder %s27, 1
      %p190 = por %p188, %p189
      %p191 = scmp.ne.s32.totalorder %s182, %s183
      %p192 = scmp.eq.s32.totalorder %s27, 0
      %p193 = por %p191, %p192
      %p194 = scmp.ne.s32.totalorder %s182, %s183
      %p195 = scmp.eq.s32.totalorder %s28, 1
      %p196 = por %p194, %p195
      %p198 = scmp.ne.s32.totalorder %s183, %s197
      %p199 = scmp.eq.s32.totalorder %s28, 0
      %p200 = por %p198, %p199
      %s202 = sadd.s32 %s201, 1
      %p205 = scmp.eq.s32.totalorder %s22, 1
      %p206 = scmp.ne.s32.totalorder %s201, %s203
      %p207 = scmp.eq.s32.totalorder %s22, 0
      %p208 = por %p206, %p207
      %p209 = scmp.ne.s32.totalorder %s201, %s203
      %p210 = scmp.eq.s32.totalorder %s27, 1
      %p211 = por %p209, %p210
      %p212 = scmp.ne.s32.totalorder %s203, %s204
      %p213 = scmp.eq.s32.totalorder %s27, 0
      %p214 = por %p212, %p213
      %p215 = scmp.ne.s32.totalorder %s203, %s204
      %p216 = scmp.eq.s32.totalorder %s28, 1
      %p217 = por %p215, %p216
      %p219 = scmp.ne.s32.totalorder %s204, %s218
      %p220 = scmp.eq.s32.totalorder %s28, 0
      %p221 = por %p219, %p220
      %s222 = ssub.s32 %s29, %s41
      %s223 = ssub.s32 %s30, %s37
      %s224 = sor.u32 %s222, %s223
      %p225 = scmp.eq.s32.totalorder %s224, 0
      %s227 = sadd.s32 %s226, 1
      %s228 = scalar_select %p225, %s226, %s227
      %p231 = pneg %p225
      %p232 = scmp.eq.s32.totalorder %s22, 1
      %p233 = por %p231, %p232
      %p234 = scmp.ne.s32.totalorder %s226, %s229
      %p235 = scmp.eq.s32.totalorder %s22, 0
      %p236 = por %p234, %p235
      %p237 = scmp.ne.s32.totalorder %s226, %s229
      %p238 = scmp.eq.s32.totalorder %s27, 1
      %p239 = por %p237, %p238
      %p240 = scmp.ne.s32.totalorder %s229, %s230
      %p241 = scmp.eq.s32.totalorder %s27, 0
      %p242 = por %p240, %p241
      %p243 = scmp.ne.s32.totalorder %s229, %s230
      %p244 = scmp.eq.s32.totalorder %s28, 1
      %p245 = por %p243, %p244
      %p247 = scmp.ne.s32.totalorder %s230, %s246
      %p248 = scmp.eq.s32.totalorder %s28, 0
      %p249 = por %p247, %p248
      %p250 = scmp.le.s32.totalorder 1, %s22
      %p251 = scmp.lt.s32.totalorder %s22, 3
      %p252 = pnand %p250, %p251
      %p253 = pneg %p252
      // Predicated region
      $region9: #{tpu_custom_call.1} parent=5 // pred_check
        _
      $region10: #{tpu_custom_call.1} parent=5 // pred_check_branch
        %255 = sbr.rel (%p252) target = $region12
      $region11: #{tpu_custom_call.1} parent=5 // pred_region
        %s256 = ssub.s32 %s22, 1
        // Predicated region
        $region13: #{tpu_custom_call.1} parent=11 // pred_check
          %p257 = pneg %p109
        $region14: #{tpu_custom_call.1} parent=11 // pred_check_branch
          %259 = sbr.rel (%p257) target = $region16
        $region15: #{tpu_custom_call.1} parent=11 // pred_region
          %s261 = ssub.s32 512, 512
          %262 = vsyncadd [#allocation8], %s261
          %s263 = sshll.u32 [#allocation7], 4
          %s264 = int_to_ptr.vmem [resolvable:$true] %s263
          %269 = dma.hbm_to_vmem [thread:$0]  %s2, 512, %s264, [#allocation8], 128, 128, 8
        $region16: #{tpu_custom_call.1} parent=11 // pred_fallthru
          _
        // Predicated region
        $region17: #{tpu_custom_call.1} parent=11 // pred_check
          %p270 = pneg %p130
        $region18: #{tpu_custom_call.1} parent=11 // pred_check_branch
          %272 = sbr.rel (%p270) target = $region20
        $region19: #{tpu_custom_call.1} parent=11 // pred_region
          %s274 = ssub.s32 512, 512
          %275 = vsyncadd [#allocation8], %s274
          %s276 = sshll.u32 [#allocation9], 4
          %s277 = int_to_ptr.vmem [resolvable:$true] %s276
          %282 = dma.hbm_to_vmem [thread:$0]  %s3, 512, %s277, [#allocation8], 128, 128, 8
        $region20: #{tpu_custom_call.1} parent=11 // pred_fallthru
          _
        // Predicated region
        $region21: #{tpu_custom_call.1} parent=11 // pred_check
          %p283 = pneg %p151
        $region22: #{tpu_custom_call.1} parent=11 // pred_check_branch
          %285 = sbr.rel (%p283) target = $region24
        $region23: #{tpu_custom_call.1} parent=11 // pred_region
          %s287 = ssub.s32 512, 512
          %288 = vsyncadd [#allocation11], %s287
          %s289 = sshll.u32 [#allocation10], 4
          %s290 = int_to_ptr.vmem [resolvable:$true] %s289
          %295 = dma.hbm_to_vmem [thread:$0]  %s4, 512, %s290, [#allocation11], 128, 128, 8
        $region24: #{tpu_custom_call.1} parent=11 // pred_fallthru
          _
        // Predicated region
        $region25: #{tpu_custom_call.1} parent=11 // pred_check
          %p296 = pneg %p172
        $region26: #{tpu_custom_call.1} parent=11 // pred_check_branch
          %298 = sbr.rel (%p296) target = $region28
        $region27: #{tpu_custom_call.1} parent=11 // pred_region
          _
        $region28: #{tpu_custom_call.1} parent=11 // pred_fallthru
          _
        // Predicated region
        $region29: #{tpu_custom_call.1} parent=11 // pred_check
          %p299 = pneg %p193
        $region30: #{tpu_custom_call.1} parent=11 // pred_check_branch
          %301 = sbr.rel (%p299) target = $region32
        $region31: #{tpu_custom_call.1} parent=11 // pred_region
          _
        $region32: #{tpu_custom_call.1} parent=11 // pred_fallthru
          _
        // Predicated region
        $region33: #{tpu_custom_call.1} parent=11 // pred_check
          %p302 = pneg %p214
        $region34: #{tpu_custom_call.1} parent=11 // pred_check_branch
          %304 = sbr.rel (%p302) target = $region36
        $region35: #{tpu_custom_call.1} parent=11 // pred_region
          _
        $region36: #{tpu_custom_call.1} parent=11 // pred_fallthru
          _
      $region12: #{tpu_custom_call.1} parent=5 // pred_fallthru
        _
      %p305 = scmp.lt.s32.totalorder %s22, 2
      // Predicated region
      $region37: #{tpu_custom_call.1} parent=5 // pred_check
        %p306 = pneg %p305
      $region38: #{tpu_custom_call.1} parent=5 // pred_check_branch
        %308 = sbr.rel (%p306) target = $region40
      $region39: #{tpu_custom_call.1} parent=5 // pred_region
        // Predicated region
        $region41: #{tpu_custom_call.1} parent=39 // pred_check
          %p309 = pneg %p56
        $region42: #{tpu_custom_call.1} parent=39 // pred_check_branch
          %311 = sbr.rel (%p309) target = $region44
        $region43: #{tpu_custom_call.1} parent=39 // pred_region
          %s312 = sand.u32 %s46, 1
          %s313 = scalar_lea.sflag [#allocation5], %s312
          %s314 = sand.u32 %s46, 1
          %s315 = smul.addr %s314, 8
          %s316 = scalar_lea.vmem [#allocation4], %s315
          %s318 = ssub.s32 128, 128
          %319 = vsyncadd %s313, %s318
          %s320 = sadd.s32 %s30, %s29
          %s321 = smul.addr %s320, 128
          %s322 = scalar_lea.hbm %s0, %s321
          %s324 = sshll.u32 %s316, 4
          %s325 = int_to_ptr.vmem [resolvable:$true] %s324
          %327 = dma.hbm_to_vmem [thread:$0]  %s322, 128, %s325, %s313
        $region44: #{tpu_custom_call.1} parent=39 // pred_fallthru
          _
        // Predicated region
        $region45: #{tpu_custom_call.1} parent=39 // pred_check
          %p328 = pneg %p82
        $region46: #{tpu_custom_call.1} parent=39 // pred_check_branch
          %330 = sbr.rel (%p328) target = $region48
        $region47: #{tpu_custom_call.1} parent=39 // pred_region
          %p331 = scmp.lt.s32.totalorder %s29, 1
          %s332 = scalar_select %p331, %s29, 1
          %s333 = smul.addr %s332, 2
          %s334 = smul.addr %s333, 8
          %s335 = scalar_lea.vmem %s1, %s334
        $region48: #{tpu_custom_call.1} parent=39 // pred_fallthru
          _
      $region40: #{tpu_custom_call.1} parent=5 // pred_fallthru
        _
      %p336 = scmp.le.s32.totalorder 1, %s22
      %p337 = scmp.lt.s32.totalorder %s22, 3
      %p338 = pnand %p336, %p337
      %p339 = pneg %p338
      // Predicated region
      $region49: #{tpu_custom_call.1} parent=5 // pred_check
        _
      $region50: #{tpu_custom_call.1} parent=5 // pred_check_branch
        %341 = sbr.rel (%p338) target = $region52
      $region51: #{tpu_custom_call.1} parent=5 // pred_region
        %s342 = ssub.s32 %s22, 1
        %s343 = sand.u32 %s49, 1
        %s344 = scalar_lea.sflag [#allocation5], %s343
        %s345 = sand.u32 %s49, 1
        %s346 = smul.addr %s345, 8
        %s347 = scalar_lea.vmem [#allocation4], %s346
        // Predicated region
        $region53: #{tpu_custom_call.1} parent=51 // pred_check
          %p348 = pneg %p62
        $region54: #{tpu_custom_call.1} parent=51 // pred_check_branch
          %350 = sbr.rel (%p348) target = $region56
        $region55: #{tpu_custom_call.1} parent=51 // pred_region
          %351 = dma.done %s344, 128
        $region56: #{tpu_custom_call.1} parent=51 // pred_fallthru
          _
        // Predicated region
        $region57: #{tpu_custom_call.1} parent=51 // pred_check
          %p352 = pneg %p109
        $region58: #{tpu_custom_call.1} parent=51 // pred_check_branch
          %354 = sbr.rel (%p352) target = $region60
        $region59: #{tpu_custom_call.1} parent=51 // pred_region
          %355 = dma.done [#allocation8], 512
        $region60: #{tpu_custom_call.1} parent=51 // pred_fallthru
          _
        // Predicated region
        $region61: #{tpu_custom_call.1} parent=51 // pred_check
          %p356 = pneg %p130
        $region62: #{tpu_custom_call.1} parent=51 // pred_check_branch
          %358 = sbr.rel (%p356) target = $region64
        $region63: #{tpu_custom_call.1} parent=51 // pred_region
          %359 = dma.done [#allocation8], 512
        $region64: #{tpu_custom_call.1} parent=51 // pred_fallthru
          _
        // Predicated region
        $region65: #{tpu_custom_call.1} parent=51 // pred_check
          %p360 = pneg %p151
        $region66: #{tpu_custom_call.1} parent=51 // pred_check_branch
          %362 = sbr.rel (%p360) target = $region68
        $region67: #{tpu_custom_call.1} parent=51 // pred_region
          %363 = dma.done [#allocation11], 512
        $region68: #{tpu_custom_call.1} parent=51 // pred_fallthru
          _
        %s364 = sand.u32 %s49, 1
        %s365 = scalar_lea.sflag [#allocation5], %s364
        %s366 = sand.u32 %s49, 1
        %s367 = smul.addr %s366, 8
        %s368 = scalar_lea.vmem [#allocation4], %s367
        %p369 = pneg %p62
        %p370 = pneg %p59
        %p371 = scmp.lt.s32.totalorder %s31, 1
        %s372 = scalar_select %p371, %s31, 1
        %s373 = smul.addr %s372, 2
        %s374 = smul.addr %s373, 8
        %s375 = scalar_lea.vmem %s1, %s374
        %p376 = pneg %p88
        %p377 = pneg %p85
        %p378 = pneg %p109
        %p379 = pneg %p106
        %p380 = pneg %p130
        %p381 = pneg %p127
        %p382 = pneg %p151
        %p383 = pneg %p148
        %p384 = pneg %p172
        %p385 = pneg %p169
        %p386 = pneg %p193
        %p387 = pneg %p190
        %p388 = pneg %p214
        %p389 = pneg %p211
        %p390 = pneg %p242
        %p391 = pneg %p239
        %s392 = sand.u32 %s229, 1
        %s393 = scalar_lea.sflag [#allocation6], %s392
        %s394 = sand.u32 %s229, 1
        %s395 = smul.addr %s394, 8
        %s396 = scalar_lea.vmem [#allocation12], %s395
        %p397 = scmp.lt.s32.totalorder %s31, 1
        %s398 = scalar_select %p397, %s31, 1
        %s399 = smul.addr %s398, 2
        %s400 = smul.addr %s399, 8
        %s401 = scalar_lea.vmem %s1, %s400
        %p402 = scmp.eq.s32.totalorder %s32, 0
        // Predicated region
        $region69: #{tpu_custom_call.1} parent=51 // pred_check
          %p403 = pneg %p402
        $region70: #{tpu_custom_call.1} parent=51 // pred_check_branch
          %405 = sbr.rel (%p403) target = $region72
        $region71: #{tpu_custom_call.1} parent=51 // pred_region
          %v406 = vld [vmem:[%s401] sm:$0xff]
          %v407 = vld [vmem:[%s401 + $0x8] sm:$0xff]
          %v408 = vld [vmem:[#allocation9] sm:$0xff]
          %v409 = vld [vmem:[#allocation9 + $0x8] sm:$0xff]
          %v410 = vld [vmem:[#allocation9 + $0x10] sm:$0xff]
          %v411 = vld [vmem:[#allocation9 + $0x18] sm:$0xff]
          %v412 = vld [vmem:[%s6] sm:$0xff]
          %v413 = vld [vmem:[%s6 + $0x8] sm:$0xff]
          %v414 = vld [vmem:[%s6 + $0x10] sm:$0xff]
          %v415 = vld [vmem:[%s6 + $0x18] sm:$0xff]
          %417 = vset.pattern.permute.xlu0 0
          %418 = vperm.xlu0 %417, %v412
          %v419 = vpop.permute.xlu0 %418
          %422 = vset.pattern.permute.xlu0 0
          %423 = vperm.xlu0 %422, %v413
          %v424 = vpop.permute.xlu0 %423
          %427 = vset.pattern.permute.xlu0 0
          %428 = vperm.xlu0 %427, %v414
          %v429 = vpop.permute.xlu0 %428
          %432 = vset.pattern.permute.xlu0 0
          %433 = vperm.xlu0 %432, %v415
          %v434 = vpop.permute.xlu0 %433
          %vm436 = vcmask 261120
          %v438 = vsel %vm436, %v408, 0
          %v441 = vsel %vm436, %v409, 0
          %v444 = vsel %vm436, %v410, 0
          %v447 = vsel %vm436, %v411, 0
          %v450 = vsel %vm436, %v406, 0
          %v453 = vsel %vm436, %v407, 0
          %455 = vmatprep.subr.mxu0 0.0
          %456 = vmatpush1.xpose.msra.mxu0 %v450
          %457 = vmatprep.subr.mxu0 0.0
          %458 = vmatpush1.xpose.msra.mxu0 %v453
          %459 = vmatprep.subr.mxu0 0.0
          %460 = vmatpush1.xpose.msra.mxu0 0.0
          %461 = vmatprep.subr.mxu0 0.0
          %462 = vmatpush1.xpose.msra.mxu0 0.0
          %463 = vmatprep.subr.mxu0 0.0
          %464 = vmatpush1.xpose.msra.mxu0 0.0
          %465 = vmatprep.subr.mxu0 0.0
          %466 = vmatpush1.xpose.msra.mxu0 0.0
          %467 = vmatprep.subr.mxu0 0.0
          %468 = vmatpush1.xpose.msra.mxu0 0.0
          %469 = vmatprep.subr.mxu0 0.0
          %470 = vmatpush1.xpose.msra.mxu0 0.0
          %471 = vmatprep.subr.mxu0 0.0
          %472 = vmatpush1.xpose.msra.mxu0 0.0
          %473 = vmatprep.subr.mxu0 0.0
          %474 = vmatpush1.xpose.msra.mxu0 0.0
          %475 = vmatprep.subr.mxu0 0.0
          %476 = vmatpush1.xpose.msra.mxu0 0.0
          %477 = vmatprep.subr.mxu0 0.0
          %478 = vmatpush1.xpose.msra.mxu0 0.0
          %479 = vmatprep.subr.mxu0 0.0
          %480 = vmatpush1.xpose.msra.mxu0 0.0
          %481 = vmatprep.subr.mxu0 0.0
          %482 = vmatpush1.xpose.msra.mxu0 0.0
          %483 = vmatprep.subr.mxu0 0.0
          %484 = vmatpush1.xpose.msra.mxu0 0.0
          %485 = vmatprep.subr.mxu0 0.0
          %486 = vmatpush1.xpose.msra.mxu0 0.0
          %487 = vmatprep.subr.mxu0 0.0
          %488 = vmatpush1.xpose.msra.mxu0 0.0
          %489 = vmatprep.subr.mxu0 0.0
          %490 = vmatpush1.xpose.msra.mxu0 0.0
          %491 = vmatprep.subr.mxu0 0.0
          %492 = vmatpush1.xpose.msra.mxu0 0.0
          %493 = vmatprep.subr.mxu0 0.0
          %494 = vmatpush1.xpose.msra.mxu0 0.0
          %495 = vmatprep.subr.mxu0 0.0
          %496 = vmatpush1.xpose.msra.mxu0 0.0
          %497 = vmatprep.subr.mxu0 0.0
          %498 = vmatpush1.xpose.msra.mxu0 0.0
          %499 = vmatprep.subr.mxu0 0.0
          %500 = vmatpush1.xpose.msra.mxu0 0.0
          %501 = vmatprep.subr.mxu0 0.0
          %502 = vmatpush1.xpose.msra.mxu0 0.0
          %503 = vmatprep.subr.mxu0 0.0
          %504 = vmatpush1.xpose.msra.mxu0 0.0
          %505 = vmatprep.subr.mxu0 0.0
          %506 = vmatpush1.xpose.msra.mxu0 0.0
          %507 = vmatprep.subr.mxu0 0.0
          %508 = vmatpush1.xpose.msra.mxu0 0.0
          %509 = vmatprep.subr.mxu0 0.0
          %510 = vmatpush1.xpose.msra.mxu0 0.0
          %511 = vmatprep.subr.mxu0 0.0
          %512 = vmatpush1.xpose.msra.mxu0 0.0
          %513 = vmatprep.subr.mxu0 0.0
          %514 = vmatpush1.xpose.msra.mxu0 0.0
          %515 = vmatprep.subr.mxu0 0.0
          %516 = vmatpush1.xpose.msra.mxu0 0.0
          %517 = vmatprep.subr.mxu0 0.0
          %518 = vmatpush1.xpose.msra.mxu0 0.0
          %519 = vmatprep.mubr.f32.mxu0 0.0
          %520 = vmatmul.mubr.f32.gmra.mrb[0].mxu0 %v438
          %v521 = vpop.f32.mrb[0].mxu0
          %v522 = vadd.f32 %v419, %v521
          %v523 = vpop.f32.mrb[0].mxu0
          %524 = vmatprep.mubr.f32.mxu0 0.0
          %525 = vmatmul.mubr.f32.gmra.mrb[0].mxu0 %v441
          %v526 = vpop.f32.mrb[0].mxu0
          %v527 = vadd.f32 %v424, %v526
          %v528 = vpop.f32.mrb[0].mxu0
          %529 = vmatprep.mubr.f32.mxu0 0.0
          %530 = vmatmul.mubr.f32.gmra.mrb[0].mxu0 %v444
          %v531 = vpop.f32.mrb[0].mxu0
          %v532 = vadd.f32 %v429, %v531
          %v533 = vpop.f32.mrb[0].mxu0
          %534 = vmatprep.mubr.f32.mxu0 0.0
          %535 = vmatmul.mubr.f32.gmra.mrb[0].mxu0 %v447
          %v536 = vpop.f32.mrb[0].mxu0
          %v537 = vadd.f32 %v434, %v536
          %v538 = vpop.f32.mrb[0].mxu0
          %539 = vdwg.mxu0
          %vm540 = vcmask 130048
          %541 = vst.msk [vmem:[#allocation2] sm:$0xff] %vm540, %v522
          %542 = vst.msk [vmem:[#allocation2 + $0x8] sm:$0xff] %vm540, %v527
          %543 = vst.msk [vmem:[#allocation2 + $0x10] sm:$0xff] %vm540, %v532
          %544 = vst.msk [vmem:[#allocation2 + $0x18] sm:$0xff] %vm540, %v537
          %v545 = vld [vmem:[#allocation10] sm:$0xff]
          %v546 = vld [vmem:[#allocation10 + $0x8] sm:$0xff]
          %v547 = vld [vmem:[#allocation10 + $0x10] sm:$0xff]
          %v548 = vld [vmem:[#allocation10 + $0x18] sm:$0xff]
          %v549 = vld [vmem:[%s7] sm:$0x1]
          %v551 = vlaneseq
          %v552 = vshrl.u32 %v551, 7
          %v553 = vsub.s32 0, %v552
          %v554 = vrot.slane %v549, %v553
          %556 = vmatprep.subr.mxu0 0.0
          %557 = vmatpush1.msra.mxu0 %v545
          %558 = vmatprep.subr.mxu0 0.0
          %559 = vmatpush1.msra.mxu0 %v546
          %560 = vmatprep.subr.mxu0 0.0
          %561 = vmatpush1.msra.mxu0 %v547
          %562 = vmatprep.subr.mxu0 0.0
          %563 = vmatpush1.msra.mxu0 %v548
          %564 = vmatprep.subr.mxu0 0.0
          %565 = vmatpush1.msra.mxu0 0.0
          %566 = vmatprep.subr.mxu0 0.0
          %567 = vmatpush1.msra.mxu0 0.0
          %568 = vmatprep.subr.mxu0 0.0
          %569 = vmatpush1.msra.mxu0 0.0
          %570 = vmatprep.subr.mxu0 0.0
          %571 = vmatpush1.msra.mxu0 0.0
          %572 = vmatprep.subr.mxu0 0.0
          %573 = vmatpush1.msra.mxu0 0.0
          %574 = vmatprep.subr.mxu0 0.0
          %575 = vmatpush1.msra.mxu0 0.0
          %576 = vmatprep.subr.mxu0 0.0
          %577 = vmatpush1.msra.mxu0 0.0
          %578 = vmatprep.subr.mxu0 0.0
          %579 = vmatpush1.msra.mxu0 0.0
          %580 = vmatprep.subr.mxu0 0.0
          %581 = vmatpush1.msra.mxu0 0.0
          %582 = vmatprep.subr.mxu0 0.0
          %583 = vmatpush1.msra.mxu0 0.0
          %584 = vmatprep.subr.mxu0 0.0
          %585 = vmatpush1.msra.mxu0 0.0
          %586 = vmatprep.subr.mxu0 0.0
          %587 = vmatpush1.msra.mxu0 0.0
          %588 = vmatprep.subr.mxu0 0.0
          %589 = vmatpush1.msra.mxu0 0.0
          %590 = vmatprep.subr.mxu0 0.0
          %591 = vmatpush1.msra.mxu0 0.0
          %592 = vmatprep.subr.mxu0 0.0
          %593 = vmatpush1.msra.mxu0 0.0
          %594 = vmatprep.subr.mxu0 0.0
          %595 = vmatpush1.msra.mxu0 0.0
          %596 = vmatprep.subr.mxu0 0.0
          %597 = vmatpush1.msra.mxu0 0.0
          %598 = vmatprep.subr.mxu0 0.0
          %599 = vmatpush1.msra.mxu0 0.0
          %600 = vmatprep.subr.mxu0 0.0
          %601 = vmatpush1.msra.mxu0 0.0
          %602 = vmatprep.subr.mxu0 0.0
          %603 = vmatpush1.msra.mxu0 0.0
          %604 = vmatprep.subr.mxu0 0.0
          %605 = vmatpush1.msra.mxu0 0.0
          %606 = vmatprep.subr.mxu0 0.0
          %607 = vmatpush1.msra.mxu0 0.0
          %608 = vmatprep.subr.mxu0 0.0
          %609 = vmatpush1.msra.mxu0 0.0
          %610 = vmatprep.subr.mxu0 0.0
          %611 = vmatpush1.msra.mxu0 0.0
          %612 = vmatprep.subr.mxu0 0.0
          %613 = vmatpush1.msra.mxu0 0.0
          %614 = vmatprep.subr.mxu0 0.0
          %615 = vmatpush1.msra.mxu0 0.0
          %616 = vmatprep.subr.mxu0 0.0
          %617 = vmatpush1.msra.mxu0 0.0
          %618 = vmatprep.subr.mxu0 0.0
          %619 = vmatpush1.msra.mxu0 0.0
          %620 = vmatprep.mubr.f32.mxu0 0.0
          %621 = vmatmul.mubr.f32.gmra.mrb[0].mxu0 %v450
          %v622 = vpop.f32.mrb[0].mxu0
          %v623 = vadd.f32 %v554, %v622
          %v624 = vpop.f32.mrb[0].mxu0
          %625 = vmatprep.mubr.f32.mxu0 0.0
          %626 = vmatmul.mubr.f32.gmra.mrb[0].mxu0 %v453
          %v627 = vpop.f32.mrb[0].mxu0
          %v628 = vadd.f32 %v554, %v627
          %v629 = vpop.f32.mrb[0].mxu0
          %630 = vdwg.mxu0
          %631 = vst.msk [vmem:[#allocation3] sm:$0xff] %vm436, %v623
          %632 = vst.msk [vmem:[#allocation3 + $0x8] sm:$0xff] %vm436, %v628
        $region72: #{tpu_custom_call.1} parent=51 // pred_fallthru
          _
        %v633 = vld [vmem:[%s347] sm:$0xff]
        %v634 = vld [vmem:[#allocation7] sm:$0xff]
        %v635 = vld [vmem:[#allocation7 + $0x8] sm:$0xff]
        %v636 = vld [vmem:[#allocation7 + $0x10] sm:$0xff]
        %v637 = vld [vmem:[#allocation7 + $0x18] sm:$0xff]
        %v638 = vld [vmem:[%s5] sm:$0x1]
        %v640 = vlaneseq
        %v641 = vshrl.u32 %v640, 7
        %v642 = vsub.s32 0, %v641
        %v643 = vrot.slane %v638, %v642
        %vm645 = vcmask 261120
        %v647 = vsel %vm645, %v633, 0
        %649 = vmatprep.subr.mxu0 0.0
        %650 = vmatpush1.msra.mxu0 %v634
        %651 = vmatprep.subr.mxu0 0.0
        %652 = vmatpush1.msra.mxu0 %v635
        %653 = vmatprep.subr.mxu0 0.0
        %654 = vmatpush1.msra.mxu0 %v636
        %655 = vmatprep.subr.mxu0 0.0
        %656 = vmatpush1.msra.mxu0 %v637
        %657 = vmatprep.subr.mxu0 0.0
        %658 = vmatpush1.msra.mxu0 0.0
        %659 = vmatprep.subr.mxu0 0.0
        %660 = vmatpush1.msra.mxu0 0.0
        %661 = vmatprep.subr.mxu0 0.0
        %662 = vmatpush1.msra.mxu0 0.0
        %663 = vmatprep.subr.mxu0 0.0
        %664 = vmatpush1.msra.mxu0 0.0
        %665 = vmatprep.subr.mxu0 0.0
        %666 = vmatpush1.msra.mxu0 0.0
        %667 = vmatprep.subr.mxu0 0.0
        %668 = vmatpush1.msra.mxu0 0.0
        %669 = vmatprep.subr.mxu0 0.0
        %670 = vmatpush1.msra.mxu0 0.0
        %671 = vmatprep.subr.mxu0 0.0
        %672 = vmatpush1.msra.mxu0 0.0
        %673 = vmatprep.subr.mxu0 0.0
        %674 = vmatpush1.msra.mxu0 0.0
        %675 = vmatprep.subr.mxu0 0.0
        %676 = vmatpush1.msra.mxu0 0.0
        %677 = vmatprep.subr.mxu0 0.0
        %678 = vmatpush1.msra.mxu0 0.0
        %679 = vmatprep.subr.mxu0 0.0
        %680 = vmatpush1.msra.mxu0 0.0
        %681 = vmatprep.subr.mxu0 0.0
        %682 = vmatpush1.msra.mxu0 0.0
        %683 = vmatprep.subr.mxu0 0.0
        %684 = vmatpush1.msra.mxu0 0.0
        %685 = vmatprep.subr.mxu0 0.0
        %686 = vmatpush1.msra.mxu0 0.0
        %687 = vmatprep.subr.mxu0 0.0
        %688 = vmatpush1.msra.mxu0 0.0
        %689 = vmatprep.subr.mxu0 0.0
        %690 = vmatpush1.msra.mxu0 0.0
        %691 = vmatprep.subr.mxu0 0.0
        %692 = vmatpush1.msra.mxu0 0.0
        %693 = vmatprep.subr.mxu0 0.0
        %694 = vmatpush1.msra.mxu0 0.0
        %695 = vmatprep.subr.mxu0 0.0
        %696 = vmatpush1.msra.mxu0 0.0
        %697 = vmatprep.subr.mxu0 0.0
        %698 = vmatpush1.msra.mxu0 0.0
        %699 = vmatprep.subr.mxu0 0.0
        %700 = vmatpush1.msra.mxu0 0.0
        %701 = vmatprep.subr.mxu0 0.0
        %702 = vmatpush1.msra.mxu0 0.0
        %703 = vmatprep.subr.mxu0 0.0
        %704 = vmatpush1.msra.mxu0 0.0
        %705 = vmatprep.subr.mxu0 0.0
        %706 = vmatpush1.msra.mxu0 0.0
        %707 = vmatprep.subr.mxu0 0.0
        %708 = vmatpush1.msra.mxu0 0.0
        %709 = vmatprep.subr.mxu0 0.0
        %710 = vmatpush1.msra.mxu0 0.0
        %711 = vmatprep.subr.mxu0 0.0
        %712 = vmatpush1.msra.mxu0 0.0
        %713 = vmatprep.mubr.f32.mxu0 0.0
        %714 = vmatmul.mubr.f32.gmra.mrb[0].mxu0 %v647
        %v715 = vpop.f32.mrb[0].mxu0
        %v716 = vadd.f32 %v643, %v715
        %v717 = vpop.f32.mrb[0].mxu0
        %718 = vdwg.mxu0
        %v719 = vld [vmem:[#allocation2] sm:$0xff]
        %v720 = vld [vmem:[#allocation2 + $0x8] sm:$0xff]
        %v721 = vld [vmem:[#allocation2 + $0x10] sm:$0xff]
        %v722 = vld [vmem:[#allocation2 + $0x18] sm:$0xff]
        %v724 = vsel %vm645, %v716, 0
        %726 = vmatprep.subr.mxu0 0.0
        %727 = vmatpush1.msra.mxu0 %v719
        %728 = vmatprep.subr.mxu0 0.0
        %729 = vmatpush1.msra.mxu0 %v720
        %730 = vmatprep.subr.mxu0 0.0
        %731 = vmatpush1.msra.mxu0 %v721
        %732 = vmatprep.subr.mxu0 0.0
        %733 = vmatpush1.msra.mxu0 %v722
        %734 = vmatprep.subr.mxu0 0.0
        %735 = vmatpush1.msra.mxu0 0.0
        %736 = vmatprep.subr.mxu0 0.0
        %737 = vmatpush1.msra.mxu0 0.0
        %738 = vmatprep.subr.mxu0 0.0
        %739 = vmatpush1.msra.mxu0 0.0
        %740 = vmatprep.subr.mxu0 0.0
        %741 = vmatpush1.msra.mxu0 0.0
        %742 = vmatprep.subr.mxu0 0.0
        %743 = vmatpush1.msra.mxu0 0.0
        %744 = vmatprep.subr.mxu0 0.0
        %745 = vmatpush1.msra.mxu0 0.0
        %746 = vmatprep.subr.mxu0 0.0
        %747 = vmatpush1.msra.mxu0 0.0
        %748 = vmatprep.subr.mxu0 0.0
        %749 = vmatpush1.msra.mxu0 0.0
        %750 = vmatprep.subr.mxu0 0.0
        %751 = vmatpush1.msra.mxu0 0.0
        %752 = vmatprep.subr.mxu0 0.0
        %753 = vmatpush1.msra.mxu0 0.0
        %754 = vmatprep.subr.mxu0 0.0
        %755 = vmatpush1.msra.mxu0 0.0
        %756 = vmatprep.subr.mxu0 0.0
        %757 = vmatpush1.msra.mxu0 0.0
        %758 = vmatprep.subr.mxu0 0.0
        %759 = vmatpush1.msra.mxu0 0.0
        %760 = vmatprep.subr.mxu0 0.0
        %761 = vmatpush1.msra.mxu0 0.0
        %762 = vmatprep.subr.mxu0 0.0
        %763 = vmatpush1.msra.mxu0 0.0
        %764 = vmatprep.subr.mxu0 0.0
        %765 = vmatpush1.msra.mxu0 0.0
        %766 = vmatprep.subr.mxu0 0.0
        %767 = vmatpush1.msra.mxu0 0.0
        %768 = vmatprep.subr.mxu0 0.0
        %769 = vmatpush1.msra.mxu0 0.0
        %770 = vmatprep.subr.mxu0 0.0
        %771 = vmatpush1.msra.mxu0 0.0
        %772 = vmatprep.subr.mxu0 0.0
        %773 = vmatpush1.msra.mxu0 0.0
        %774 = vmatprep.subr.mxu0 0.0
        %775 = vmatpush1.msra.mxu0 0.0
        %776 = vmatprep.subr.mxu0 0.0
        %777 = vmatpush1.msra.mxu0 0.0
        %778 = vmatprep.subr.mxu0 0.0
        %779 = vmatpush1.msra.mxu0 0.0
        %780 = vmatprep.subr.mxu0 0.0
        %781 = vmatpush1.msra.mxu0 0.0
        %782 = vmatprep.subr.mxu0 0.0
        %783 = vmatpush1.msra.mxu0 0.0
        %784 = vmatprep.subr.mxu0 0.0
        %785 = vmatpush1.msra.mxu0 0.0
        %786 = vmatprep.subr.mxu0 0.0
        %787 = vmatpush1.msra.mxu0 0.0
        %788 = vmatprep.subr.mxu0 0.0
        %789 = vmatpush1.msra.mxu0 0.0
        %790 = vmatprep.mubr.f32.mxu0 0.0
        %791 = vmatmul.mubr.f32.gmra.mrb[0].mxu0 %v724
        %v792 = vpop.f32.mrb[0].mxu0
        %v793 = vadd.f32 0.0, %v792
        %v794 = vpop.f32.mrb[0].mxu0
        %795 = vdwg.mxu0
        %vm796 = vcmask 130048
        %v797 = vsel %vm796, %v793, -inf
        %798 = vmax.xlane.f32.xlu0 %v797
        %v799 = vpop.xlane.xlu0 %798
        %v800 = vsub.f32 %v793, %v799
        %v801 = vmul.f32 %v800, 1.442695
        %v802 = vpow.pop %v801
        %v803 = vsel %vm796, %v802, 0.0
        %804 = vadd.xlane.f32.xlu0 %v803
        %v805 = vpop.xlane.xlu0 %804
        %v806 = vld [vmem:[#allocation3] sm:$0xff]
        %v807 = vld [vmem:[#allocation3 + $0x8] sm:$0xff]
        %v809 = vsel %vm796, %v802, 0
        %811 = vmatprep.subr.mxu0 0.0
        %812 = vmatpush1.msra.mxu0 %v806
        %813 = vmatprep.subr.mxu0 0.0
        %814 = vmatpush1.msra.mxu0 %v807
        %815 = vmatprep.subr.mxu0 0.0
        %816 = vmatpush1.msra.mxu0 0.0
        %817 = vmatprep.subr.mxu0 0.0
        %818 = vmatpush1.msra.mxu0 0.0
        %819 = vmatprep.subr.mxu0 0.0
        %820 = vmatpush1.msra.mxu0 0.0
        %821 = vmatprep.subr.mxu0 0.0
        %822 = vmatpush1.msra.mxu0 0.0
        %823 = vmatprep.subr.mxu0 0.0
        %824 = vmatpush1.msra.mxu0 0.0
        %825 = vmatprep.subr.mxu0 0.0
        %826 = vmatpush1.msra.mxu0 0.0
        %827 = vmatprep.subr.mxu0 0.0
        %828 = vmatpush1.msra.mxu0 0.0
        %829 = vmatprep.subr.mxu0 0.0
        %830 = vmatpush1.msra.mxu0 0.0
        %831 = vmatprep.subr.mxu0 0.0
        %832 = vmatpush1.msra.mxu0 0.0
        %833 = vmatprep.subr.mxu0 0.0
        %834 = vmatpush1.msra.mxu0 0.0
        %835 = vmatprep.subr.mxu0 0.0
        %836 = vmatpush1.msra.mxu0 0.0
        %837 = vmatprep.subr.mxu0 0.0
        %838 = vmatpush1.msra.mxu0 0.0
        %839 = vmatprep.subr.mxu0 0.0
        %840 = vmatpush1.msra.mxu0 0.0
        %841 = vmatprep.subr.mxu0 0.0
        %842 = vmatpush1.msra.mxu0 0.0
        %843 = vmatprep.subr.mxu0 0.0
        %844 = vmatpush1.msra.mxu0 0.0
        %845 = vmatprep.subr.mxu0 0.0
        %846 = vmatpush1.msra.mxu0 0.0
        %847 = vmatprep.subr.mxu0 0.0
        %848 = vmatpush1.msra.mxu0 0.0
        %849 = vmatprep.subr.mxu0 0.0
        %850 = vmatpush1.msra.mxu0 0.0
        %851 = vmatprep.subr.mxu0 0.0
        %852 = vmatpush1.msra.mxu0 0.0
        %853 = vmatprep.subr.mxu0 0.0
        %854 = vmatpush1.msra.mxu0 0.0
        %855 = vmatprep.subr.mxu0 0.0
        %856 = vmatpush1.msra.mxu0 0.0
        %857 = vmatprep.subr.mxu0 0.0
        %858 = vmatpush1.msra.mxu0 0.0
        %859 = vmatprep.subr.mxu0 0.0
        %860 = vmatpush1.msra.mxu0 0.0
        %861 = vmatprep.subr.mxu0 0.0
        %862 = vmatpush1.msra.mxu0 0.0
        %863 = vmatprep.subr.mxu0 0.0
        %864 = vmatpush1.msra.mxu0 0.0
        %865 = vmatprep.subr.mxu0 0.0
        %866 = vmatpush1.msra.mxu0 0.0
        %867 = vmatprep.subr.mxu0 0.0
        %868 = vmatpush1.msra.mxu0 0.0
        %869 = vmatprep.subr.mxu0 0.0
        %870 = vmatpush1.msra.mxu0 0.0
        %871 = vmatprep.subr.mxu0 0.0
        %872 = vmatpush1.msra.mxu0 0.0
        %873 = vmatprep.subr.mxu0 0.0
        %874 = vmatpush1.msra.mxu0 0.0
        %875 = vmatprep.mubr.f32.mxu0 0.0
        %876 = vmatmul.mubr.f32.gmra.mrb[0].mxu0 %v809
        %v877 = vpop.f32.mrb[0].mxu0
        %v878 = vadd.f32 0.0, %v877
        %v879 = vpop.f32.mrb[0].mxu0
        %880 = vdwg.mxu0
        %v881 = vrcp.pop %v805
        %v882 = vmul.f32 %v878, %v881
        %883 = vst.msk [vmem:[%s396] sm:$0xff] %vm645, %v882
        %s884 = sand.u32 %s229, 1
        %s885 = scalar_lea.sflag [#allocation6], %s884
        %s886 = sand.u32 %s229, 1
        %s887 = smul.addr %s886, 8
        %s888 = scalar_lea.vmem [#allocation12], %s887
        // Predicated region
        $region73: #{tpu_custom_call.1} parent=51 // pred_check
          %p889 = pneg %p239
        $region74: #{tpu_custom_call.1} parent=51 // pred_check_branch
          %891 = sbr.rel (%p889) target = $region76
        $region75: #{tpu_custom_call.1} parent=51 // pred_region
          %s893 = ssub.s32 128, 128
          %894 = vsyncadd %s885, %s893
          %s895 = sadd.s32 %s32, %s31
          %s896 = smul.addr %s895, 128
          %s897 = scalar_lea.hbm %s8, %s896
          %s899 = sshll.u32 %s888, 4
          %s900 = int_to_ptr.vmem [resolvable:$true] %s899
          %902 = dma.vmem_to_hbm [thread:$0]  %s900, 128, %s897, %s885
        $region76: #{tpu_custom_call.1} parent=51 // pred_fallthru
          _
      $region52: #{tpu_custom_call.1} parent=5 // pred_fallthru
        _
      %p903 = scmp.le.s32.totalorder 2, %s22
      // Predicated region
      $region77: #{tpu_custom_call.1} parent=5 // pred_check
        %p904 = pneg %p903
      $region78: #{tpu_custom_call.1} parent=5 // pred_check_branch
        %906 = sbr.rel (%p904) target = $region80
      $region79: #{tpu_custom_call.1} parent=5 // pred_region
        %s907 = ssub.s32 %s22, 2
        // Predicated region
        $region81: #{tpu_custom_call.1} parent=79 // pred_check
          %p908 = pneg %p245
        $region82: #{tpu_custom_call.1} parent=79 // pred_check_branch
          %910 = sbr.rel (%p908) target = $region84
        $region83: #{tpu_custom_call.1} parent=79 // pred_region
          %s911 = sand.u32 %s230, 1
          %s912 = scalar_lea.sflag [#allocation6], %s911
          %s913 = sand.u32 %s230, 1
          %s914 = smul.addr %s913, 8
          %s915 = scalar_lea.vmem [#allocation12], %s914
          %916 = dma.done %s912, 128
        $region84: #{tpu_custom_call.1} parent=79 // pred_fallthru
          _
      $region80: #{tpu_custom_call.1} parent=5 // pred_fallthru
        _
    $region6: #{tpu_custom_call.1} parent=1 // loop_footer
      %s26 = sadd.s32 1, %s22
    $region7: #{tpu_custom_call.1} parent=1 // loop_footer_branch
      %21 = sbr.rel target = $region3
    $region8: #{tpu_custom_call.1} parent=1 // loop_exit
      _
    %917 = vsyncpa [#allocation5], 1
    %s918 = scalar_lea.sflag [#allocation5], 1
    %919 = vsyncpa %s918, 1
    %920 = vsyncpa [#allocation8], 1
    %921 = vsyncpa [#allocation11], 1
    %922 = vsyncpa [#allocation6], 1
    %s923 = scalar_lea.sflag [#allocation6], 1
    %924 = vsyncpa %s923, 1

</llo_original>
